<compile_context>
chip_gen: v6e
topology: v6e:2x2x1
jax: 0.10.0
libtpu: 0.0.40
codegen_flags: <defaults>
</compile_context>

<pallas_src>
import jax
import jax.numpy as jnp
from jax.experimental import pallas as pl
from jax.experimental.pallas import tpu as pltpu


# ----------------------------------------------------------------------------
# Vocabulary / sizes exactly as implied by the PyTorch script
# ----------------------------------------------------------------------------
EMBEDDING_SIZE = 2
SENTENCES = ['Kage is Teacher', 'Mazong is Boss', 'Niuzong is Boss',
             'Xiaobing is Student', 'Xiaoxue is Student']
WORDS = ' '.join(SENTENCES).split()
WORD_LIST = sorted(set(WORDS))     # deterministic vocab order
VOC_SIZE = len(WORD_LIST)          # 9

CTX_LEN = 4                        # context words per example (CBOW window)
BATCH = 16                         # examples per forward call
TB = 8                             # batch tile per grid step (sublane-aligned)


# ----------------------------------------------------------------------------
# Pallas kernel: in-register one-hot mean -> two MXU matmuls
# ----------------------------------------------------------------------------
def cbow_kernel(ids_ref, w1t_ref, w2t_ref, out_ref):
    """One batch tile of the CBOW forward.

    ids_ref : VMEM (TB, CTX) int32  -- context word ids for this tile
    w1t_ref : VMEM (VOC, EMB) f32   -- W1.T (transposed once at setup)
    w2t_ref : VMEM (EMB, VOC) f32   -- W2.T (transposed once at setup)
    out_ref : VMEM (TB, VOC) f32
    """
    ids = ids_ref[...]                                          # (TB, CTX)
    voc_iota = jax.lax.broadcasted_iota(jnp.int32, (TB, VOC_SIZE), 1)

    # Build mean(one_hot(ids), axis=ctx) directly in vregs: 4 static
    # iota-compares + adds on the VPU.  Never materialized in HBM.
    counts = jnp.zeros((TB, VOC_SIZE), jnp.float32)
    for c in range(CTX_LEN):                                    # static unroll
        counts = counts + (ids[:, c:c + 1] == voc_iota).astype(jnp.float32)
    mean_onehot = counts * jnp.float32(1.0 / CTX_LEN)           # (TB, VOC)

    # Layer 1: mean(one_hot) @ W1.T  == mean(X @ W1.T, dim=0) per example.
    hidden = jnp.dot(mean_onehot, w1t_ref[...],
                     preferred_element_type=jnp.float32)        # (TB, EMB)

    # Layer 2: hidden @ W2.T -> one wide store per grid step.
    out_ref[...] = jnp.dot(hidden, w2t_ref[...],
                           preferred_element_type=jnp.float32)  # (TB, VOC)


@jax.jit
def cbow_forward(ctx_ids, w1t, w2t):
    """Batched CBOW forward.

    ctx_ids : (BATCH, CTX_LEN) int32  context-word indices (rows of one-hot X)
    w1t     : (VOC, EMB) f32          = W1.T, transposed once at param setup
    w2t     : (EMB, VOC) f32          = W2.T, transposed once at param setup
    returns : (BATCH, VOC) f32        row b == CBOW.forward(one_hot(ctx_ids[b]))
    """
    batch, ctx = ctx_ids.shape
    voc, emb = w1t.shape
    assert batch % TB == 0

    cost = pl.CostEstimate(
        flops=batch * (ctx * voc + 2 * voc * emb + 2 * emb * voc),
        transcendentals=0,
        bytes_accessed=(ctx_ids.size * 4 + w1t.size * 4 + w2t.size * 4
                        + batch * voc * 4),
    )

    return pl.pallas_call(
        cbow_kernel,
        out_shape=jax.ShapeDtypeStruct((batch, voc), jnp.float32),
        grid_spec=pltpu.PrefetchScalarGridSpec(
            num_scalar_prefetch=0,
            grid=(batch // TB,),
            in_specs=[
                pl.BlockSpec((TB, ctx), lambda i: (i, 0)),
                # tiny weights: full-array blocks (block == array dims is legal)
                pl.BlockSpec((voc, emb), lambda i: (0, 0)),
                pl.BlockSpec((emb, voc), lambda i: (0, 0)),
            ],
            out_specs=pl.BlockSpec((TB, voc), lambda i: (i, 0)),
        ),
        compiler_params=pltpu.CompilerParams(
            dimension_semantics=("parallel",),   # batch axis -> megacore split
        ),
        cost_estimate=cost,
    )(ctx_ids, w1t, w2t)


# ----------------------------------------------------------------------------
# Pure-JAX reference (PyTorch-layout weights, explicit one-hot path)
# ----------------------------------------------------------------------------
def cbow_ref(ctx_ids, w1, w2):
    x = jax.nn.one_hot(ctx_ids, VOC_SIZE, dtype=jnp.float32)   # (B, ctx, voc)
    emb = jnp.einsum('bcv,ev->bce', x, w1)                     # X @ W1.T
    hidden = jnp.mean(emb, axis=1)                             # mean over dim=0
    return hidden @ w2.T                                       # (B, voc)


if __name__ == "__main__":
    key = jax.random.PRNGKey(0)
    k1, k2, k3 = jax.random.split(key, 3)

    # Parameter init per nn.Linear (out_features, in_features),
    # uniform(-1/sqrt(fan_in), 1/sqrt(fan_in)).
    b1 = 1.0 / (VOC_SIZE ** 0.5)
    w1 = jax.random.uniform(k1, (EMBEDDING_SIZE, VOC_SIZE),
                            minval=-b1, maxval=b1, dtype=jnp.float32)
    b2 = 1.0 / (EMBEDDING_SIZE ** 0.5)
    w2 = jax.random.uniform(k2, (VOC_SIZE, EMBEDDING_SIZE),
                            minval=-b2, maxval=b2, dtype=jnp.float32)

    # One-time layout prep, OUTSIDE the jitted per-call forward path.
    w1t = jnp.asarray(w1.T)    # (voc, emb)
    w2t = jnp.asarray(w2.T)    # (emb, voc)

    # Batch of contexts, each CTX_LEN word ids (the rows of the one-hot X).
    ctx_ids = jax.random.randint(k3, (BATCH, CTX_LEN), 0, VOC_SIZE,
                                 dtype=jnp.int32)

    out = cbow_forward(ctx_ids, w1t, w2t)
    out = jax.block_until_ready(out)

    ref = cbow_ref(ctx_ids, w1, w2)
    assert out.shape == (BATCH, VOC_SIZE)
    assert jnp.allclose(out, ref, atol=1e-5, rtol=1e-5), "mismatch vs reference"

    print("KERNEL_OK")
</pallas_src>

<mosaic_0001>
module attributes {stable_mosaic.version = 11 : i64} {
  func.func @cbow_kernel(%arg0: i32, %arg1: memref<8x4xi32, #tpu.memory_space<vmem>>, %arg2: memref<9x2xf32, #tpu.memory_space<vmem>>, %arg3: memref<2x9xf32, #tpu.memory_space<vmem>>, %arg4: memref<8x9xf32, #tpu.memory_space<vmem>>) attributes {dimension_semantics = [#tpu.dimension_semantics<parallel>], iteration_bounds = array<i64: 2>, scalar_prefetch = 0 : i64, scratch_operands = 0 : i64, tpu.core_type = #tpu.core_type<tc>, window_params = [{transform_indices = @transform_0, window_bounds = array<i64: 8, 4>}, {pipeline_mode = #tpu.pipeline_mode<synchronous>, transform_indices = @transform_1, window_bounds = array<i64: 9, 2>}, {pipeline_mode = #tpu.pipeline_mode<synchronous>, transform_indices = @transform_2, window_bounds = array<i64: 2, 9>}, {transform_indices = @transform_3, window_bounds = array<i64: 8, 9>}]} {
    %c0 = arith.constant 0 : index
    %c0_0 = arith.constant 0 : index
    %0 = vector.load %arg1[%c0, %c0_0] : memref<8x4xi32, #tpu.memory_space<vmem>>, vector<8x4xi32>
    %1 = tpu.iota {dimensions = array<i32: 1>} : vector<8x9xi32>
    %cst = arith.constant 0.000000e+00 : f32
    %2 = vector.broadcast %cst : f32 to vector<8x9xf32>
    %3 = vector.extract_strided_slice %0 {offsets = [0, 0], sizes = [8, 1], strides = [1, 1]} : vector<8x4xi32> to vector<8x1xi32>
    %4 = vector.broadcast %3 : vector<8x1xi32> to vector<8x9xi32>
    %5 = arith.cmpi eq, %4, %1 : vector<8x9xi32>
    %6 = arith.extui %5 : vector<8x9xi1> to vector<8x9xi32>
    %7 = arith.sitofp %6 : vector<8x9xi32> to vector<8x9xf32>
    %8 = arith.addf %2, %7 : vector<8x9xf32>
    %9 = vector.extract_strided_slice %0 {offsets = [0, 1], sizes = [8, 1], strides = [1, 1]} : vector<8x4xi32> to vector<8x1xi32>
    %10 = vector.broadcast %9 : vector<8x1xi32> to vector<8x9xi32>
    %11 = arith.cmpi eq, %10, %1 : vector<8x9xi32>
    %12 = arith.extui %11 : vector<8x9xi1> to vector<8x9xi32>
    %13 = arith.sitofp %12 : vector<8x9xi32> to vector<8x9xf32>
    %14 = arith.addf %8, %13 : vector<8x9xf32>
    %15 = vector.extract_strided_slice %0 {offsets = [0, 2], sizes = [8, 1], strides = [1, 1]} : vector<8x4xi32> to vector<8x1xi32>
    %16 = vector.broadcast %15 : vector<8x1xi32> to vector<8x9xi32>
    %17 = arith.cmpi eq, %16, %1 : vector<8x9xi32>
    %18 = arith.extui %17 : vector<8x9xi1> to vector<8x9xi32>
    %19 = arith.sitofp %18 : vector<8x9xi32> to vector<8x9xf32>
    %20 = arith.addf %14, %19 : vector<8x9xf32>
    %21 = vector.extract_strided_slice %0 {offsets = [0, 3], sizes = [8, 1], strides = [1, 1]} : vector<8x4xi32> to vector<8x1xi32>
    %22 = vector.broadcast %21 : vector<8x1xi32> to vector<8x9xi32>
    %23 = arith.cmpi eq, %22, %1 : vector<8x9xi32>
    %24 = arith.extui %23 : vector<8x9xi1> to vector<8x9xi32>
    %25 = arith.sitofp %24 : vector<8x9xi32> to vector<8x9xf32>
    %26 = arith.addf %20, %25 : vector<8x9xf32>
    %cst_1 = arith.constant 2.500000e-01 : f32
    %27 = vector.broadcast %cst_1 : f32 to vector<8x9xf32>
    %28 = arith.mulf %26, %27 : vector<8x9xf32>
    %c0_2 = arith.constant 0 : index
    %c0_3 = arith.constant 0 : index
    %29 = vector.load %arg2[%c0_2, %c0_3] : memref<9x2xf32, #tpu.memory_space<vmem>>, vector<9x2xf32>
    %cst_4 = arith.constant dense<0.000000e+00> : vector<8x2xf32>
    %30 = tpu.matmul %28, %29, %cst_4 {dimension_numbers = #tpu.dot_dimension_numbers<[1], [0], [0], [1], [0, 0, 1, 1], [], []>} : vector<8x9xf32>, vector<9x2xf32>, vector<8x2xf32> -> vector<8x2xf32>
    %c0_5 = arith.constant 0 : index
    %c0_6 = arith.constant 0 : index
    %31 = vector.load %arg3[%c0_5, %c0_6] : memref<2x9xf32, #tpu.memory_space<vmem>>, vector<2x9xf32>
    %cst_7 = arith.constant dense<0.000000e+00> : vector<8x9xf32>
    %32 = tpu.matmul %30, %31, %cst_7 {dimension_numbers = #tpu.dot_dimension_numbers<[1], [0], [0], [1], [0, 0, 1, 1], [], []>} : vector<8x2xf32>, vector<2x9xf32>, vector<8x9xf32> -> vector<8x9xf32>
    %c0_8 = arith.constant 0 : index
    %c0_9 = arith.constant 0 : index
    %33 = vector.load %arg4[%c0_8, %c0_9] : memref<8x9xf32, #tpu.memory_space<vmem>>, vector<8x9xf32>
    tpu.vector_store %arg4[%c0_8, %c0_9], %32 {strides = array<i32>} : memref<8x9xf32, #tpu.memory_space<vmem>>, vector<8x9xf32>,
    return
  }
  func.func @transform_0(%arg0: i32) -> (i32, i32) {
    %c0_i32 = arith.constant 0 : i32
    %c0_i32_0 = arith.constant 0 : i32
    return %arg0, %c0_i32 : i32, i32
  }
  func.func @transform_1(%arg0: i32) -> (i32, i32) {
    %c0_i32 = arith.constant 0 : i32
    %c0_i32_0 = arith.constant 0 : i32
    %c0_i32_1 = arith.constant 0 : i32
    return %c0_i32, %c0_i32_0 : i32, i32
  }
  func.func @transform_2(%arg0: i32) -> (i32, i32) {
    %c0_i32 = arith.constant 0 : i32
    %c0_i32_0 = arith.constant 0 : i32
    %c0_i32_1 = arith.constant 0 : i32
    return %c0_i32, %c0_i32_0 : i32, i32
  }
  func.func @transform_3(%arg0: i32) -> (i32, i32) {
    %c0_i32 = arith.constant 0 : i32
    %c0_i32_0 = arith.constant 0 : i32
    return %arg0, %c0_i32 : i32, i32
  }
}

</mosaic_0001>

<llo_original>
// kernel: cbow_forward.1
$region0: #{cbow_forward.1}
  #allocation0 [shape = 'u32[]', space=smem, size = 0x4, offset = 0x4, fixed_abs, tag = 'smem constant byte address 0x4 - core index']
  #allocation1 [shape = 'u32[144,128]{1,0:T(1,128)}', space=vmem, size = 0x12000, scoped, tag = 'internal scratch']
  %s0 = inlined_call_operand.vmem [shape: s32[16,4], index: 0, kind: input, shape index: {}]
  %s1 = inlined_call_operand.vmem [shape: f32[9,2], index: 1, kind: input, shape index: {}]
  %s2 = inlined_call_operand.vmem [shape: f32[2,9], index: 2, kind: input, shape index: {}]
  %s3 = inlined_call_operand.hbm [shape: f32[16,9], index: 3, kind: output, shape index: {}]
  %s4 = sld [smem:[#allocation0]]
  $region45: #{cbow_forward.1} parent=0
    _
  %s6 = ssub.s32 1, %s4
  %s7 = scalar_select 0, %s6, %s4
  $region1: #{cbow_forward.1} parent=0
    #allocation2 [shape = 'u8[8192]{0}', space=vmem, size = 0x2000, scoped, tag = 'output window, operand 0']
    #allocation3 [shape = 's32[2]{0}', space=sflag, size = 0x8, scoped, tag = 'scoped memory for cbow_forward.1']
    %8 = vsyncpa [#allocation3], 0
    %s9 = scalar_lea.sflag [#allocation3], 1
    %10 = vsyncpa %s9, 0
    loop: start=0, step=1, limit=4
    $region2: #{cbow_forward.1} parent=1 // loop_pre_header
      _
    $region3: #{cbow_forward.1} parent=1 // loop_header
      %s12 = sphi 0, %s16
      %p13 = scmp.ge.s32.totalorder %s12, 4
      %s22 = sphi 0, %s24
      %s25 = sphi 0, %s22
      %s26 = sphi 0, %s25
      %s42 = sphi 0, %s26
      %s46 = sphi 0, %s46
      %s48 = sphi 0, %s46
      %s49 = sphi 0, %s48
      %s63 = sphi 0, %s49
      %s67 = sphi 0, %s67
      %s69 = sphi 0, %s67
      %s70 = sphi 0, %s69
      %s84 = sphi 0, %s70
      %s90 = sphi 0, %s92
      %s93 = sphi 0, %s90
      %s94 = sphi 0, %s93
      %s110 = sphi 0, %s94
    $region4: #{cbow_forward.1} parent=1 // loop_header_branch
      %15 = sbr.rel (%p13) target = $region8
    $region5: #{cbow_forward.1} parent=1 // loop_body
      %s17 = ssub.s32 %s12, 1
      %s18 = ssub.s32 %s12, 2
      %s19 = sadd.s32 %s12, 1
      %s20 = ssub.s32 %s12, %s19
      %p21 = scmp.eq.s32.totalorder %s20, 0
      %s23 = sadd.s32 %s22, 1
      %s24 = scalar_select %p21, %s22, %s23
      %p27 = pneg %p21
      %p28 = scmp.eq.s32.totalorder %s12, 1
      %p29 = por %p27, %p28
      %p30 = scmp.ne.s32.totalorder %s22, %s25
      %p31 = scmp.eq.s32.totalorder %s12, 0
      %p32 = por %p30, %p31
      %p33 = scmp.ne.s32.totalorder %s22, %s25
      %p34 = scmp.eq.s32.totalorder %s17, 1
      %p35 = por %p33, %p34
      %p36 = scmp.ne.s32.totalorder %s25, %s26
      %p37 = scmp.eq.s32.totalorder %s17, 0
      %p38 = por %p36, %p37
      %p39 = scmp.ne.s32.totalorder %s25, %s26
      %p40 = scmp.eq.s32.totalorder %s18, 1
      %p41 = por %p39, %p40
      %p43 = scmp.ne.s32.totalorder %s26, %s42
      %p44 = scmp.eq.s32.totalorder %s18, 0
      %p45 = por %p43, %p44
      %s47 = sadd.s32 %s46, 1
      %p50 = scmp.eq.s32.totalorder %s12, 1
      %p51 = scmp.ne.s32.totalorder %s46, %s48
      %p52 = scmp.eq.s32.totalorder %s12, 0
      %p53 = por %p51, %p52
      %p54 = scmp.ne.s32.totalorder %s46, %s48
      %p55 = scmp.eq.s32.totalorder %s17, 1
      %p56 = por %p54, %p55
      %p57 = scmp.ne.s32.totalorder %s48, %s49
      %p58 = scmp.eq.s32.totalorder %s17, 0
      %p59 = por %p57, %p58
      %p60 = scmp.ne.s32.totalorder %s48, %s49
      %p61 = scmp.eq.s32.totalorder %s18, 1
      %p62 = por %p60, %p61
      %p64 = scmp.ne.s32.totalorder %s49, %s63
      %p65 = scmp.eq.s32.totalorder %s18, 0
      %p66 = por %p64, %p65
      %s68 = sadd.s32 %s67, 1
      %p71 = scmp.eq.s32.totalorder %s12, 1
      %p72 = scmp.ne.s32.totalorder %s67, %s69
      %p73 = scmp.eq.s32.totalorder %s12, 0
      %p74 = por %p72, %p73
      %p75 = scmp.ne.s32.totalorder %s67, %s69
      %p76 = scmp.eq.s32.totalorder %s17, 1
      %p77 = por %p75, %p76
      %p78 = scmp.ne.s32.totalorder %s69, %s70
      %p79 = scmp.eq.s32.totalorder %s17, 0
      %p80 = por %p78, %p79
      %p81 = scmp.ne.s32.totalorder %s69, %s70
      %p82 = scmp.eq.s32.totalorder %s18, 1
      %p83 = por %p81, %p82
      %p85 = scmp.ne.s32.totalorder %s70, %s84
      %p86 = scmp.eq.s32.totalorder %s18, 0
      %p87 = por %p85, %p86
      %s88 = ssub.s32 %s12, %s19
      %p89 = scmp.eq.s32.totalorder %s88, 0
      %s91 = sadd.s32 %s90, 1
      %s92 = scalar_select %p89, %s90, %s91
      %p95 = pneg %p89
      %p96 = scmp.eq.s32.totalorder %s12, 1
      %p97 = por %p95, %p96
      %p98 = scmp.ne.s32.totalorder %s90, %s93
      %p99 = scmp.eq.s32.totalorder %s12, 0
      %p100 = por %p98, %p99
      %p101 = scmp.ne.s32.totalorder %s90, %s93
      %p102 = scmp.eq.s32.totalorder %s17, 1
      %p103 = por %p101, %p102
      %p104 = scmp.ne.s32.totalorder %s93, %s94
      %p105 = scmp.eq.s32.totalorder %s17, 0
      %p106 = por %p104, %p105
      %p107 = scmp.ne.s32.totalorder %s93, %s94
      %p108 = scmp.eq.s32.totalorder %s18, 1
      %p109 = por %p107, %p108
      %p111 = scmp.ne.s32.totalorder %s94, %s110
      %p112 = scmp.eq.s32.totalorder %s18, 0
      %p113 = por %p111, %p112
      %p114 = scmp.le.s32.totalorder 1, %s12
      %p115 = scmp.lt.s32.totalorder %s12, 3
      %p116 = pnand %p114, %p115
      %p117 = pneg %p116
      // Predicated region
      $region9: #{cbow_forward.1} parent=5 // pred_check
        _
      $region10: #{cbow_forward.1} parent=5 // pred_check_branch
        %119 = sbr.rel (%p116) target = $region12
      $region11: #{cbow_forward.1} parent=5 // pred_region
        %s120 = ssub.s32 %s12, 1
        // Predicated region
        $region13: #{cbow_forward.1} parent=11 // pred_check
          %p121 = pneg %p59
        $region14: #{cbow_forward.1} parent=11 // pred_check_branch
          %123 = sbr.rel (%p121) target = $region16
        $region15: #{cbow_forward.1} parent=11 // pred_region
          _
        $region16: #{cbow_forward.1} parent=11 // pred_fallthru
          _
        // Predicated region
        $region17: #{cbow_forward.1} parent=11 // pred_check
          %p124 = pneg %p80
        $region18: #{cbow_forward.1} parent=11 // pred_check_branch
          %126 = sbr.rel (%p124) target = $region20
        $region19: #{cbow_forward.1} parent=11 // pred_region
          _
        $region20: #{cbow_forward.1} parent=11 // pred_fallthru
          _
      $region12: #{cbow_forward.1} parent=5 // pred_fallthru
        _
      %p127 = scmp.lt.s32.totalorder %s12, 2
      // Predicated region
      $region21: #{cbow_forward.1} parent=5 // pred_check
        %p128 = pneg %p127
      $region22: #{cbow_forward.1} parent=5 // pred_check_branch
        %130 = sbr.rel (%p128) target = $region24
      $region23: #{cbow_forward.1} parent=5 // pred_region
        // Predicated region
        $region25: #{cbow_forward.1} parent=23 // pred_check
          %p131 = pneg %p32
        $region26: #{cbow_forward.1} parent=23 // pred_check_branch
          %133 = sbr.rel (%p131) target = $region28
        $region27: #{cbow_forward.1} parent=23 // pred_region
          %p134 = scmp.lt.s32.totalorder %s12, 1
          %s135 = scalar_select %p134, %s12, 1
          %s136 = smul.addr %s135, 8
          %s137 = scalar_lea.vmem %s0, %s136
        $region28: #{cbow_forward.1} parent=23 // pred_fallthru
          _
      $region24: #{cbow_forward.1} parent=5 // pred_fallthru
        _
      %p138 = scmp.le.s32.totalorder 1, %s12
      %p139 = scmp.lt.s32.totalorder %s12, 3
      %p140 = pnand %p138, %p139
      %p141 = pneg %p140
      // Predicated region
      $region29: #{cbow_forward.1} parent=5 // pred_check
        _
      $region30: #{cbow_forward.1} parent=5 // pred_check_branch
        %143 = sbr.rel (%p140) target = $region32
      $region31: #{cbow_forward.1} parent=5 // pred_region
        %s144 = ssub.s32 %s12, 1
        %p145 = scmp.lt.s32.totalorder %s17, 1
        %s146 = scalar_select %p145, %s17, 1
        %s147 = smul.addr %s146, 8
        %s148 = scalar_lea.vmem %s0, %s147
        %p149 = pneg %p38
        %p150 = pneg %p35
        %p151 = pneg %p59
        %p152 = pneg %p56
        %p153 = pneg %p80
        %p154 = pneg %p77
        %p155 = pneg %p106
        %p156 = pneg %p103
        %s157 = sand.u32 %s93, 1
        %s158 = scalar_lea.sflag [#allocation3], %s157
        %s159 = sand.u32 %s93, 1
        %s160 = smul.addr %s159, 8
        %s161 = scalar_lea.vmem [#allocation2], %s160
        %p162 = scmp.lt.s32.totalorder %s17, 1
        %s163 = scalar_select %p162, %s17, 1
        %s164 = smul.addr %s163, 8
        %s165 = scalar_lea.vmem %s0, %s164
        %v166 = vld [vmem:[%s165] sm:$0xff]
        %v167 = vlaneseq
        %v168 = vand.u32 %v167, 127
        %169 = vset.pattern.permute.xlu0 0
        %170 = vperm.xlu0 %169, %v166
        %v171 = vpop.permute.xlu0 %170
        %vm172 = vcmp.eq.s32.totalorder %v171, %v168
        %v173 = vsel %vm172, 1, 0
        %v174 = vcvt.s32.f32 %v173
        %v175 = vadd.f32 %v174, 0.0
        %176 = vset.pattern.permute.xlu0 1
        %177 = vperm.xlu0 %176, %v166
        %v178 = vpop.permute.xlu0 %177
        %vm179 = vcmp.eq.s32.totalorder %v178, %v168
        %v180 = vsel %vm179, 1, 0
        %v181 = vcvt.s32.f32 %v180
        %v182 = vadd.f32 %v175, %v181
        %183 = vset.pattern.permute.xlu0 2
        %184 = vperm.xlu0 %183, %v166
        %v185 = vpop.permute.xlu0 %184
        %vm186 = vcmp.eq.s32.totalorder %v185, %v168
        %v187 = vsel %vm186, 1, 0
        %v188 = vcvt.s32.f32 %v187
        %v189 = vadd.f32 %v182, %v188
        %190 = vset.pattern.permute.xlu0 3
        %191 = vperm.xlu0 %190, %v166
        %v192 = vpop.permute.xlu0 %191
        %vm193 = vcmp.eq.s32.totalorder %v192, %v168
        %v194 = vsel %vm193, 1, 0
        %v195 = vcvt.s32.f32 %v194
        %v196 = vadd.f32 %v189, %v195
        %v197 = vmul.f32 %v196, 0.25
        %v198 = vld [vmem:[%s1] sm:$0xff]
        %v199 = vld [vmem:[%s1 + $0x8] sm:$0x1]
        %vm200 = vcmask 72704
        %v202 = vsel %vm200, %v197, 0
        %vm204 = vcmask 1040384
        %v206 = vsel %vm204, %v199, 0
        %208 = vmatprep.subr.mxu0 0.0
        %209 = vmatpush1.msra.mxu0 0.0
        %210 = vmatprep.subr.mxu0 0.0
        %211 = vmatpush1.msra.mxu0 0.0
        %212 = vmatprep.subr.mxu0 0.0
        %213 = vmatpush1.msra.mxu0 0.0
        %214 = vmatprep.subr.mxu0 0.0
        %215 = vmatpush1.msra.mxu0 0.0
        %216 = vmatprep.subr.mxu0 0.0
        %217 = vmatpush1.msra.mxu0 0.0
        %218 = vmatprep.subr.mxu0 0.0
        %219 = vmatpush1.msra.mxu0 0.0
        %220 = vmatprep.subr.mxu0 0.0
        %221 = vmatpush1.msra.mxu0 0.0
        %222 = vmatprep.subr.mxu0 0.0
        %223 = vmatpush1.msra.mxu0 0.0
        %224 = vmatprep.subr.mxu0 0.0
        %225 = vmatpush1.msra.mxu0 0.0
        %226 = vmatprep.subr.mxu0 0.0
        %227 = vmatpush1.msra.mxu0 0.0
        %228 = vmatprep.subr.mxu0 0.0
        %229 = vmatpush1.msra.mxu0 0.0
        %230 = vmatprep.subr.mxu0 0.0
        %231 = vmatpush1.msra.mxu0 0.0
        %232 = vmatprep.subr.mxu0 0.0
        %233 = vmatpush1.msra.mxu0 0.0
        %234 = vmatprep.subr.mxu0 0.0
        %235 = vmatpush1.msra.mxu0 0.0
        %236 = vmatprep.subr.mxu0 0.0
        %237 = vmatpush1.msra.mxu0 %v206
        %238 = vmatprep.subr.mxu0 0.0
        %239 = vmatpush1.msra.mxu0 %v198
        %240 = vmatprep.subr.mxu0 0.0
        %241 = vmatpush2.msra.mxu0 0.0
        %242 = vmatprep.subr.mxu0 0.0
        %243 = vmatpush2.msra.mxu0 0.0
        %244 = vmatprep.subr.mxu0 0.0
        %245 = vmatpush2.msra.mxu0 0.0
        %246 = vmatprep.subr.mxu0 0.0
        %247 = vmatpush2.msra.mxu0 0.0
        %248 = vmatprep.subr.mxu0 0.0
        %249 = vmatpush2.msra.mxu0 0.0
        %250 = vmatprep.subr.mxu0 0.0
        %251 = vmatpush2.msra.mxu0 0.0
        %252 = vmatprep.subr.mxu0 0.0
        %253 = vmatpush2.msra.mxu0 0.0
        %254 = vmatprep.subr.mxu0 0.0
        %255 = vmatpush2.msra.mxu0 0.0
        %256 = vmatprep.subr.mxu0 0.0
        %257 = vmatpush2.msra.mxu0 0.0
        %258 = vmatprep.subr.mxu0 0.0
        %259 = vmatpush2.msra.mxu0 0.0
        %260 = vmatprep.subr.mxu0 0.0
        %261 = vmatpush2.msra.mxu0 0.0
        %262 = vmatprep.subr.mxu0 0.0
        %263 = vmatpush2.msra.mxu0 0.0
        %264 = vmatprep.subr.mxu0 0.0
        %265 = vmatpush2.msra.mxu0 0.0
        %266 = vmatprep.subr.mxu0 0.0
        %267 = vmatpush2.msra.mxu0 0.0
        %268 = vmatprep.subr.mxu0 0.0
        %269 = vmatpush2.msra.mxu0 0.0
        %270 = vmatprep.subr.mxu0 0.0
        %271 = vmatpush2.msra.mxu0 0.0
        %272 = vmatprep.mubr.f32.mxu0 0.0
        %273 = vmatmul.mubr.f32.gmra.mxu0 %v202
        %v274 = vpop.f32.mrf.mxu0
        %v275 = vadd.f32 0.0, %v274
        %v276 = vpop.f32.mrf.mxu0
        %277 = vdwg.mxu0
        %v278 = vld [vmem:[%s2] sm:$0x3]
        %vm279 = vcmask 15360
        %v281 = vsel %vm279, %v275, 0
        %vm283 = vcmask 1041408
        %v285 = vsel %vm283, %v278, 0
        %287 = vmatprep.subr.mxu0 0.0
        %288 = vmatpush1.msra.mxu0 0.0
        %289 = vmatprep.subr.mxu0 0.0
        %290 = vmatpush1.msra.mxu0 0.0
        %291 = vmatprep.subr.mxu0 0.0
        %292 = vmatpush1.msra.mxu0 0.0
        %293 = vmatprep.subr.mxu0 0.0
        %294 = vmatpush1.msra.mxu0 0.0
        %295 = vmatprep.subr.mxu0 0.0
        %296 = vmatpush1.msra.mxu0 0.0
        %297 = vmatprep.subr.mxu0 0.0
        %298 = vmatpush1.msra.mxu0 0.0
        %299 = vmatprep.subr.mxu0 0.0
        %300 = vmatpush1.msra.mxu0 0.0
        %301 = vmatprep.subr.mxu0 0.0
        %302 = vmatpush1.msra.mxu0 0.0
        %303 = vmatprep.subr.mxu0 0.0
        %304 = vmatpush1.msra.mxu0 0.0
        %305 = vmatprep.subr.mxu0 0.0
        %306 = vmatpush1.msra.mxu0 0.0
        %307 = vmatprep.subr.mxu0 0.0
        %308 = vmatpush1.msra.mxu0 0.0
        %309 = vmatprep.subr.mxu0 0.0
        %310 = vmatpush1.msra.mxu0 0.0
        %311 = vmatprep.subr.mxu0 0.0
        %312 = vmatpush1.msra.mxu0 0.0
        %313 = vmatprep.subr.mxu0 0.0
        %314 = vmatpush1.msra.mxu0 0.0
        %315 = vmatprep.subr.mxu0 0.0
        %316 = vmatpush1.msra.mxu0 0.0
        %317 = vmatprep.subr.mxu0 0.0
        %318 = vmatpush1.msra.mxu0 %v285
        %319 = vmatprep.subr.mxu0 0.0
        %320 = vmatpush2.msra.mxu0 0.0
        %321 = vmatprep.subr.mxu0 0.0
        %322 = vmatpush2.msra.mxu0 0.0
        %323 = vmatprep.subr.mxu0 0.0
        %324 = vmatpush2.msra.mxu0 0.0
        %325 = vmatprep.subr.mxu0 0.0
        %326 = vmatpush2.msra.mxu0 0.0
        %327 = vmatprep.subr.mxu0 0.0
        %328 = vmatpush2.msra.mxu0 0.0
        %329 = vmatprep.subr.mxu0 0.0
        %330 = vmatpush2.msra.mxu0 0.0
        %331 = vmatprep.subr.mxu0 0.0
        %332 = vmatpush2.msra.mxu0 0.0
        %333 = vmatprep.subr.mxu0 0.0
        %334 = vmatpush2.msra.mxu0 0.0
        %335 = vmatprep.subr.mxu0 0.0
        %336 = vmatpush2.msra.mxu0 0.0
        %337 = vmatprep.subr.mxu0 0.0
        %338 = vmatpush2.msra.mxu0 0.0
        %339 = vmatprep.subr.mxu0 0.0
        %340 = vmatpush2.msra.mxu0 0.0
        %341 = vmatprep.subr.mxu0 0.0
        %342 = vmatpush2.msra.mxu0 0.0
        %343 = vmatprep.subr.mxu0 0.0
        %344 = vmatpush2.msra.mxu0 0.0
        %345 = vmatprep.subr.mxu0 0.0
        %346 = vmatpush2.msra.mxu0 0.0
        %347 = vmatprep.subr.mxu0 0.0
        %348 = vmatpush2.msra.mxu0 0.0
        %349 = vmatprep.subr.mxu0 0.0
        %350 = vmatpush2.msra.mxu0 0.0
        %351 = vmatprep.mubr.f32.mxu0 0.0
        %352 = vmatmul.mubr.f32.gmra.mxu0 %v281
        %v353 = vpop.f32.mrf.mxu0
        %v354 = vadd.f32 0.0, %v353
        %v355 = vpop.f32.mrf.mxu0
        %356 = vdwg.mxu0
        %357 = vst.msk [vmem:[%s161] sm:$0xff] %vm200, %v354
        %s358 = sand.u32 %s93, 1
        %s359 = scalar_lea.sflag [#allocation3], %s358
        %s360 = sand.u32 %s93, 1
        %s361 = smul.addr %s360, 8
        %s362 = scalar_lea.vmem [#allocation2], %s361
        // Predicated region
        $region33: #{cbow_forward.1} parent=31 // pred_check
          %p363 = pneg %p103
        $region34: #{cbow_forward.1} parent=31 // pred_check_branch
          %365 = sbr.rel (%p363) target = $region36
        $region35: #{cbow_forward.1} parent=31 // pred_region
          %s367 = ssub.s32 128, 128
          %368 = vsyncadd %s359, %s367
          %s369 = smul.addr %s17, 128
          %s370 = scalar_lea.hbm %s3, %s369
          %s372 = sshll.u32 %s362, 4
          %s373 = int_to_ptr.vmem [resolvable:$true] %s372
          %375 = dma.vmem_to_hbm [thread:$0]  %s373, 128, %s370, %s359
        $region36: #{cbow_forward.1} parent=31 // pred_fallthru
          _
      $region32: #{cbow_forward.1} parent=5 // pred_fallthru
        _
      %p376 = scmp.le.s32.totalorder 2, %s12
      // Predicated region
      $region37: #{cbow_forward.1} parent=5 // pred_check
        %p377 = pneg %p376
      $region38: #{cbow_forward.1} parent=5 // pred_check_branch
        %379 = sbr.rel (%p377) target = $region40
      $region39: #{cbow_forward.1} parent=5 // pred_region
        %s380 = ssub.s32 %s12, 2
        // Predicated region
        $region41: #{cbow_forward.1} parent=39 // pred_check
          %p381 = pneg %p109
        $region42: #{cbow_forward.1} parent=39 // pred_check_branch
          %383 = sbr.rel (%p381) target = $region44
        $region43: #{cbow_forward.1} parent=39 // pred_region
          %s384 = sand.u32 %s94, 1
          %s385 = scalar_lea.sflag [#allocation3], %s384
          %s386 = sand.u32 %s94, 1
          %s387 = smul.addr %s386, 8
          %s388 = scalar_lea.vmem [#allocation2], %s387
          %389 = dma.done %s385, 128
        $region44: #{cbow_forward.1} parent=39 // pred_fallthru
          _
      $region40: #{cbow_forward.1} parent=5 // pred_fallthru
        _
    $region6: #{cbow_forward.1} parent=1 // loop_footer
      %s16 = sadd.s32 1, %s12
    $region7: #{cbow_forward.1} parent=1 // loop_footer_branch
      %11 = sbr.rel target = $region3
    $region8: #{cbow_forward.1} parent=1 // loop_exit
      _
    %390 = vsyncpa [#allocation3], 1
    %s391 = scalar_lea.sflag [#allocation3], 1
    %392 = vsyncpa %s391, 1

</llo_original>
